<compile_context>
chip_gen: v7x
topology: tpu7x:2x2x1
jax: 0.10.0
libtpu: 0.0.40
codegen_flags: <defaults>
</compile_context>

<pallas_src>
import jax
import jax.numpy as jnp
from jax import lax
from jax.experimental import pallas as pl
from jax.experimental.pallas import tpu as pltpu

NEG = -1e30       # "minus infinity" for padded tags (finite to avoid inf-inf NaN)
TAGSET = 6        # {'B','I','O',START,STOP,PAD}
AUX_COL = TAGSET  # fused aux_fc output lives in this emission column
TP = 128          # lane-padded tag dimension
NP = 8            # sublane-padded prev-tag dimension for the CRF transition


# ----------------------------------------------------------------------------
# Fused kernel: emission = hidden @ W + b  (bf16 MXU, f32 acc)
#               then CRF Viterbi decode (torchcrf semantics), one row / step
# ----------------------------------------------------------------------------
def fused_crf_kernel(lens_ref,                               # scalar prefetch (SMEM)
                     h_ref, w_ref, b_ref, start_ref, end_ref, trans_ref,
                     path_ref, row0_ref,                     # outputs
                     em_ref, hist_ref):                      # VMEM scratch
    b = pl.program_id(0)
    S = h_ref.shape[1]
    tp = w_ref.shape[1]
    npad = trans_ref.shape[0]                                # 8 prev-tag sublanes

    # ---- fused projection (hidden2tag cols 0..5, aux_fc col 6) --------------
    em = jnp.dot(h_ref[0], w_ref[...],
                 preferred_element_type=jnp.float32) + b_ref[...]   # (S, tp) f32
    em_ref[...] = em
    row0_ref[...] = em[0:1, :].reshape(1, 1, tp)             # row 0 -> aux logit in wrapper

    # ---- Viterbi forward DP (f32; cur tags in lanes, prev tags in sublanes) -
    lane_r = lax.broadcasted_iota(jnp.int32, (1, tp), 1)
    sub8 = lax.broadcasted_iota(jnp.int32, (npad, tp), 0)
    lane8 = lax.broadcasted_iota(jnp.int32, (npad, tp), 1)
    diag = lane8 == sub8
    trans = trans_ref[...]                                   # (npad, tp)

    seq_len = lens_ref[b]
    hist_ref[0:1, :] = jnp.zeros((1, tp), jnp.int32)         # row 0 is never used; keep it defined

    def fwd(i, score):                                       # score: (1, tp) f32 in vregs
        em_i = em_ref[pl.ds(i, 1), :]                        # (1, tp)
        # cheap row->column reorientation of the 8 prev-tag lanes: select + lane-reduce
        score_col = jnp.sum(jnp.where(diag, score, 0.0),
                            axis=1, keepdims=True)           # (npad, 1)
        nxt = score_col + trans + em_i                       # (npad, tp)  [prev, cur]
        best = jnp.max(nxt, axis=0, keepdims=True)           # (1, tp)
        idx = jnp.min(jnp.where(nxt == best, sub8, npad),
                      axis=0, keepdims=True)                 # argmax over prev, (1, tp) i32
        hist_ref[pl.ds(i, 1), :] = idx                       # one vector store; no scalar work
        return best

    score0 = start_ref[...] + em[0:1, :]
    score = lax.fori_loop(1, seq_len, fwd, score0)           # dynamic trip count

    # ---- termination ---------------------------------------------------------
    final = score + end_ref[...]                             # (1, tp)
    maxv = jnp.max(final, axis=1, keepdims=True)             # (1, 1)
    best0 = jnp.min(jnp.where(final == maxv, lane_r, tp),
                    axis=1, keepdims=True).astype(jnp.int32) # (1, 1)

    # ---- backtrack: stays in vector registers, dynamic trip count ------------
    pos = lax.broadcasted_iota(jnp.int32, (1, 1, S), 2)
    path0 = jnp.full((1, 1, S), -1, jnp.int32)
    seq_end = seq_len - 1

    def bwd(k, carry):
        best, path = carry                                   # (1,1) i32, (1,1,S) i32
        j = seq_end - k
        path = jnp.where(pos == j, best.reshape(1, 1, 1), path)
        row = hist_ref[pl.ds(j, 1), :]                       # (1, tp) i32
        nb = jnp.sum(jnp.where(lane_r == best, row, 0),
                     axis=1, keepdims=True).astype(jnp.int32)
        best = jnp.where(j >= 1, nb, best)
        return best, path

    _, path = lax.fori_loop(0, seq_len, bwd, (best0, path0))
    path_ref[...] = path                                     # single lane-dense write


def crf_decode_fused(hidden, w_proj, b_proj, start_p, end_p, trans_p, lens):
    B, S, H = hidden.shape
    tp = w_proj.shape[1]
    npad = trans_p.shape[0]
    h_bf = hidden.astype(jnp.bfloat16)                       # bf16 matmul inputs (review)
    w_bf = w_proj.astype(jnp.bfloat16)
    path, row0 = pl.pallas_call(
        fused_crf_kernel,
        out_shape=(jax.ShapeDtypeStruct((B, 1, S), jnp.int32),
                   jax.ShapeDtypeStruct((B, 1, tp), jnp.float32)),
        grid_spec=pltpu.PrefetchScalarGridSpec(
            num_scalar_prefetch=1,
            grid=(B,),
            in_specs=[
                pl.BlockSpec((1, S, H), lambda b, l: (b, 0, 0)),   # hidden row
                pl.BlockSpec((H, tp), lambda b, l: (0, 0)),        # fused weight (resident)
                pl.BlockSpec((1, tp), lambda b, l: (0, 0)),        # fused bias
                pl.BlockSpec((1, tp), lambda b, l: (0, 0)),        # start transitions
                pl.BlockSpec((1, tp), lambda b, l: (0, 0)),        # end transitions
                pl.BlockSpec((npad, tp), lambda b, l: (0, 0)),     # transitions
            ],
            out_specs=[
                pl.BlockSpec((1, 1, S), lambda b, l: (b, 0, 0)),   # decoded path
                pl.BlockSpec((1, 1, tp), lambda b, l: (b, 0, 0)),  # emission row 0 (aux logit)
            ],
            scratch_shapes=[
                pltpu.VMEM((S, tp), jnp.float32),                  # emission scratch
                pltpu.VMEM((S, tp), jnp.int32),                    # backpointer history
            ],
        ),
        compiler_params=pltpu.CompilerParams(dimension_semantics=("parallel",)),
    )(lens, h_bf, w_bf, b_proj, start_p, end_p, trans_p)
    return path[:, 0, :], row0[:, 0, :]


# ----------------------------------------------------------------------------
# Model wrapper (inference branch of my_model.forward)
# ----------------------------------------------------------------------------
def my_model_forward(hidden, attention_mask, params):
    (w_proj, b_proj, start_p, end_p, trans_p) = params
    # NOTE: assumes right-padded (left-aligned) attention masks, like torchcrf.
    lens = jnp.sum(attention_mask.astype(jnp.int32), axis=1).astype(jnp.int32)
    prediction, row0 = crf_decode_fused(hidden, w_proj, b_proj,
                                        start_p, end_p, trans_p, lens)
    cls_logits = row0[:, AUX_COL:AUX_COL + 1]                # aux_fc(hidden[:,0,:]) -> (B, 1)
    return prediction, cls_logits                            # prediction: (B, S), -1 padded


def init_params(H, T=TAGSET, tp=TP, npad=NP, seed=0):
    key = jax.random.PRNGKey(seed)
    k1, k2, k3, k4, k5, k6, k7 = jax.random.split(key, 7)
    w_tag = 0.1 * jax.random.normal(k1, (H, T), jnp.float32)   # hidden2tag.weight^T
    b_tag = 0.1 * jax.random.normal(k2, (T,), jnp.float32)
    w_aux = 0.1 * jax.random.normal(k3, (H, 1), jnp.float32)   # aux_fc.weight^T
    b_aux = 0.1 * jax.random.normal(k4, (1,), jnp.float32)
    start_t = jax.random.uniform(k5, (T,), jnp.float32, -0.1, 0.1)   # CRF params
    end_t = jax.random.uniform(k6, (T,), jnp.float32, -0.1, 0.1)
    trans = jax.random.uniform(k7, (T, T), jnp.float32, -0.1, 0.1)

    # fused projection weight: cols [0:T) = hidden2tag, col T = aux_fc
    w_proj = (jnp.zeros((H, tp), jnp.float32)
              .at[:, :T].set(w_tag)
              .at[:, T].set(w_aux[:, 0]))
    b_proj = (jnp.zeros((1, tp), jnp.float32)
              .at[0, :T].set(b_tag)
              .at[0, T].set(b_aux[0]))
    start_p = jnp.full((1, tp), NEG, jnp.float32).at[0, :T].set(start_t)
    end_p = jnp.full((1, tp), NEG, jnp.float32).at[0, :T].set(end_t)
    trans_p = jnp.full((npad, tp), NEG, jnp.float32).at[:T, :T].set(trans)
    return (w_proj, b_proj, start_p, end_p, trans_p)


if __name__ == "__main__":
    B, S, H = 2, 16, 32
    key = jax.random.PRNGKey(0)
    kx, _ = jax.random.split(key)
    # stand-in for backbone(**inputs).last_hidden_state
    hidden = jax.random.normal(kx, (B, S, H), jnp.float32)
    lens = jnp.array([16, 10], dtype=jnp.int32)
    attention_mask = (jnp.arange(S)[None, :] < lens[:, None]).astype(jnp.int32)

    params = init_params(H)
    prediction, cls_logits = my_model_forward(hidden, attention_mask, params)
    jax.block_until_ready((prediction, cls_logits))

    assert prediction.shape == (B, S) and cls_logits.shape == (B, 1)
    valid = attention_mask.astype(bool)
    in_range = bool(jnp.all(jnp.where(valid,
                                      (prediction >= 0) & (prediction < TAGSET),
                                      True)))
    pad_ok = bool(jnp.all(jnp.where(valid, True, prediction == -1)))
    assert in_range and pad_ok
    print("KERNEL_OK")
</pallas_src>

<mosaic_0001>
module attributes {stable_mosaic.version = 11 : i64} {
  func.func @fused_crf_kernel(%arg0: i32, %arg1: memref<2xi32, #tpu.memory_space<smem>>, %arg2: memref<1x16x32xbf16, #tpu.memory_space<vmem>>, %arg3: memref<32x128xbf16, #tpu.memory_space<vmem>>, %arg4: memref<1x128xf32, #tpu.memory_space<vmem>>, %arg5: memref<1x128xf32, #tpu.memory_space<vmem>>, %arg6: memref<1x128xf32, #tpu.memory_space<vmem>>, %arg7: memref<8x128xf32, #tpu.memory_space<vmem>>, %arg8: memref<1x1x16xi32, #tpu.memory_space<vmem>>, %arg9: memref<1x1x128xf32, #tpu.memory_space<vmem>>, %arg10: memref<16x128xf32, #tpu.memory_space<vmem>>, %arg11: memref<16x128xi32, #tpu.memory_space<vmem>>) attributes {dimension_semantics = [#tpu.dimension_semantics<parallel>], iteration_bounds = array<i64: 2>, scalar_prefetch = 1 : i64, scratch_operands = 2 : i64, tpu.core_type = #tpu.core_type<tc>, window_params = [{transform_indices = @transform_0, window_bounds = array<i64: 1, 16, 32>}, {pipeline_mode = #tpu.pipeline_mode<synchronous>, transform_indices = @transform_1, window_bounds = array<i64: 32, 128>}, {pipeline_mode = #tpu.pipeline_mode<synchronous>, transform_indices = @transform_2, window_bounds = array<i64: 1, 128>}, {pipeline_mode = #tpu.pipeline_mode<synchronous>, transform_indices = @transform_3, window_bounds = array<i64: 1, 128>}, {pipeline_mode = #tpu.pipeline_mode<synchronous>, transform_indices = @transform_4, window_bounds = array<i64: 1, 128>}, {pipeline_mode = #tpu.pipeline_mode<synchronous>, transform_indices = @transform_5, window_bounds = array<i64: 8, 128>}, {transform_indices = @transform_6, window_bounds = array<i64: 1, 1, 16>}, {transform_indices = @transform_7, window_bounds = array<i64: 1, 1, 128>}]} {
    %c0 = arith.constant 0 : index
    %c0_0 = arith.constant 0 : index
    %c0_1 = arith.constant 0 : index
    %0 = vector.load %arg2[%c0, %c0_0, %c0_1] : memref<1x16x32xbf16, #tpu.memory_space<vmem>>, vector<1x16x32xbf16>
    %1 = vector.shape_cast %0 : vector<1x16x32xbf16> to vector<16x32xbf16>
    %c0_2 = arith.constant 0 : index
    %c0_3 = arith.constant 0 : index
    %2 = vector.load %arg3[%c0_2, %c0_3] : memref<32x128xbf16, #tpu.memory_space<vmem>>, vector<32x128xbf16>
    %cst = arith.constant dense<0.000000e+00> : vector<16x128xf32>
    %3 = tpu.matmul %1, %2, %cst {dimension_numbers = #tpu.dot_dimension_numbers<[1], [0], [0], [1], [0, 0, 1, 1], [], []>} : vector<16x32xbf16>, vector<32x128xbf16>, vector<16x128xf32> -> vector<16x128xf32>
    %c0_4 = arith.constant 0 : index
    %c0_5 = arith.constant 0 : index
    %4 = vector.load %arg4[%c0_4, %c0_5] : memref<1x128xf32, #tpu.memory_space<vmem>>, vector<1x128xf32>
    %5 = vector.broadcast %4 : vector<1x128xf32> to vector<16x128xf32>
    %6 = arith.addf %3, %5 : vector<16x128xf32>
    %c0_6 = arith.constant 0 : index
    %c0_7 = arith.constant 0 : index
    %7 = vector.load %arg10[%c0_6, %c0_7] : memref<16x128xf32, #tpu.memory_space<vmem>>, vector<16x128xf32>
    tpu.vector_store %arg10[%c0_6, %c0_7], %6 {strides = array<i32>} : memref<16x128xf32, #tpu.memory_space<vmem>>, vector<16x128xf32>,
    %8 = vector.extract_strided_slice %6 {offsets = [0, 0], sizes = [1, 128], strides = [1, 1]} : vector<16x128xf32> to vector<1x128xf32>
    %9 = vector.shape_cast %8 : vector<1x128xf32> to vector<1x1x128xf32>
    %c0_8 = arith.constant 0 : index
    %c0_9 = arith.constant 0 : index
    %c0_10 = arith.constant 0 : index
    %10 = vector.load %arg9[%c0_8, %c0_9, %c0_10] : memref<1x1x128xf32, #tpu.memory_space<vmem>>, vector<1x1x128xf32>
    tpu.vector_store %arg9[%c0_8, %c0_9, %c0_10], %9 {strides = array<i32>} : memref<1x1x128xf32, #tpu.memory_space<vmem>>, vector<1x1x128xf32>,
    %11 = tpu.iota {dimensions = array<i32: 1>} : vector<1x128xi32>
    %12 = tpu.iota {dimensions = array<i32: 0>} : vector<8x128xi32>
    %13 = tpu.iota {dimensions = array<i32: 1>} : vector<8x128xi32>
    %14 = arith.cmpi eq, %13, %12 : vector<8x128xi32>
    %c0_11 = arith.constant 0 : index
    %c0_12 = arith.constant 0 : index
    %15 = vector.load %arg7[%c0_11, %c0_12] : memref<8x128xf32, #tpu.memory_space<vmem>>, vector<8x128xf32>
    %16 = arith.index_cast %arg0 : i32 to index
    %17 = memref.load %arg1[%16] : memref<2xi32, #tpu.memory_space<smem>>
    %c0_i32 = arith.constant 0 : i32
    %18 = vector.broadcast %c0_i32 : i32 to vector<1x128xi32>
    %c0_13 = arith.constant 0 : index
    %c0_14 = arith.constant 0 : index
    %19 = vector.load %arg11[%c0_13, %c0_14] : memref<16x128xi32, #tpu.memory_space<vmem>>, vector<1x128xi32>
    tpu.vector_store %arg11[%c0_13, %c0_14], %18 {strides = array<i32>} : memref<16x128xi32, #tpu.memory_space<vmem>>, vector<1x128xi32>,
    %c0_15 = arith.constant 0 : index
    %c0_16 = arith.constant 0 : index
    %20 = vector.load %arg5[%c0_15, %c0_16] : memref<1x128xf32, #tpu.memory_space<vmem>>, vector<1x128xf32>
    %21 = vector.extract_strided_slice %6 {offsets = [0, 0], sizes = [1, 128], strides = [1, 1]} : vector<16x128xf32> to vector<1x128xf32>
    %22 = arith.addf %20, %21 : vector<1x128xf32>
    %c1_i32 = arith.constant 1 : i32
    %23 = arith.subi %17, %c1_i32 : i32
    %24 = arith.addi %c1_i32, %23 : i32
    %c1_i32_17 = arith.constant 1 : i32
    %25 = scf.for %arg12 = %c1_i32 to %24 step %c1_i32_17 iter_args(%arg13 = %22) -> (vector<1x128xf32>)  : i32 {
      %43 = arith.index_cast %arg12 : i32 to index
      %c0_28 = arith.constant 0 : index
      %44 = vector.load %arg10[%43, %c0_28] : memref<16x128xf32, #tpu.memory_space<vmem>>, vector<1x128xf32>
      %cst_29 = arith.constant 0.000000e+00 : f32
      %45 = vector.shape_cast %arg13 : vector<1x128xf32> to vector<1x128xf32>
      %46 = vector.broadcast %45 : vector<1x128xf32> to vector<8x128xf32>
      %47 = vector.broadcast %cst_29 : f32 to vector<8x128xf32>
      %48 = arith.select %14, %46, %47 : vector<8x128xi1>, vector<8x128xf32>
      %cst_30 = arith.constant dense<0.000000e+00> : vector<8xf32>
      %49 = vector.multi_reduction <add>, %48, %cst_30 [1] : vector<8x128xf32> to vector<8xf32>
      %50 = vector.shape_cast %49 : vector<8xf32> to vector<8x1xf32>
      %51 = vector.broadcast %50 : vector<8x1xf32> to vector<8x128xf32>
      %52 = arith.addf %51, %15 : vector<8x128xf32>
      %53 = vector.broadcast %44 : vector<1x128xf32> to vector<8x128xf32>
      %54 = arith.addf %52, %53 : vector<8x128xf32>
      %cst_31 = arith.constant dense<0xFF800000> : vector<128xf32>
      %55 = vector.multi_reduction <maximumf>, %54, %cst_31 [0] : vector<8x128xf32> to vector<128xf32>
      %56 = vector.shape_cast %55 : vector<128xf32> to vector<1x128xf32>
      %57 = vector.broadcast %56 : vector<1x128xf32> to vector<8x128xf32>
      %58 = arith.cmpf oeq, %54, %57 : vector<8x128xf32>
      %c8_i32 = arith.constant 8 : i32
      %59 = vector.broadcast %c8_i32 : i32 to vector<8x128xi32>
      %60 = arith.select %58, %12, %59 : vector<8x128xi1>, vector<8x128xi32>
      %cst_32 = arith.constant dense<2147483647> : vector<128xi32>
      %61 = vector.multi_reduction <minsi>, %60, %cst_32 [0] : vector<8x128xi32> to vector<128xi32>
      %62 = vector.shape_cast %61 : vector<128xi32> to vector<1x128xi32>
      %63 = arith.index_cast %arg12 : i32 to index
      %c0_33 = arith.constant 0 : index
      %64 = vector.load %arg11[%63, %c0_33] : memref<16x128xi32, #tpu.memory_space<vmem>>, vector<1x128xi32>
      tpu.vector_store %arg11[%63, %c0_33], %62 {strides = array<i32>} : memref<16x128xi32, #tpu.memory_space<vmem>>, vector<1x128xi32>,
      scf.yield %56 : vector<1x128xf32>
    }
    %c0_18 = arith.constant 0 : index
    %c0_19 = arith.constant 0 : index
    %26 = vector.load %arg6[%c0_18, %c0_19] : memref<1x128xf32, #tpu.memory_space<vmem>>, vector<1x128xf32>
    %27 = arith.addf %25, %26 : vector<1x128xf32>
    %cst_20 = arith.constant dense<0xFF800000> : vector<1xf32>
    %28 = vector.multi_reduction <maximumf>, %27, %cst_20 [1] : vector<1x128xf32> to vector<1xf32>
    %29 = vector.shape_cast %28 : vector<1xf32> to vector<1x1xf32>
    %30 = vector.broadcast %29 : vector<1x1xf32> to vector<1x128xf32>
    %31 = arith.cmpf oeq, %27, %30 : vector<1x128xf32>
    %c128_i32 = arith.constant 128 : i32
    %32 = vector.broadcast %c128_i32 : i32 to vector<1x128xi32>
    %33 = arith.select %31, %11, %32 : vector<1x128xi1>, vector<1x128xi32>
    %cst_21 = arith.constant dense<2147483647> : vector<1xi32>
    %34 = vector.multi_reduction <minsi>, %33, %cst_21 [1] : vector<1x128xi32> to vector<1xi32>
    %35 = vector.shape_cast %34 : vector<1xi32> to vector<1x1xi32>
    %36 = tpu.iota {dimensions = array<i32: 2>} : vector<1x1x16xi32>
    %c-1_i32 = arith.constant -1 : i32
    %37 = vector.broadcast %c-1_i32 : i32 to vector<1x1x16xi32>
    %c1_i32_22 = arith.constant 1 : i32
    %38 = arith.subi %17, %c1_i32_22 : i32
    %c0_i32_23 = arith.constant 0 : i32
    %39 = arith.subi %17, %c0_i32_23 : i32
    %40 = arith.addi %c0_i32_23, %39 : i32
    %c1_i32_24 = arith.constant 1 : i32
    %41:2 = scf.for %arg12 = %c0_i32_23 to %40 step %c1_i32_24 iter_args(%arg13 = %35, %arg14 = %37) -> (vector<1x1xi32>, vector<1x1x16xi32>)  : i32 {
      %43 = arith.subi %38, %arg12 : i32
      %44 = vector.broadcast %43 : i32 to vector<1x1x16xi32>
      %45 = arith.cmpi eq, %36, %44 : vector<1x1x16xi32>
      %46 = vector.shape_cast %arg13 : vector<1x1xi32> to vector<1x1x1xi32>
      %47 = vector.shape_cast %46 : vector<1x1x1xi32> to vector<1x1x1xi32>
      %48 = vector.broadcast %47 : vector<1x1x1xi32> to vector<1x1x16xi32>
      %49 = arith.select %45, %48, %arg14 : vector<1x1x16xi1>, vector<1x1x16xi32>
      %50 = arith.index_cast %43 : i32 to index
      %c0_28 = arith.constant 0 : index
      %51 = vector.load %arg11[%50, %c0_28] : memref<16x128xi32, #tpu.memory_space<vmem>>, vector<1x128xi32>
      %52 = vector.broadcast %arg13 : vector<1x1xi32> to vector<1x128xi32>
      %53 = arith.cmpi eq, %11, %52 : vector<1x128xi32>
      %c0_i32_29 = arith.constant 0 : i32
      %54 = vector.broadcast %c0_i32_29 : i32 to vector<1x128xi32>
      %55 = arith.select %53, %51, %54 : vector<1x128xi1>, vector<1x128xi32>
      %cst_30 = arith.constant dense<0> : vector<1xi32>
      %56 = vector.multi_reduction <add>, %55, %cst_30 [1] : vector<1x128xi32> to vector<1xi32>
      %57 = vector.shape_cast %56 : vector<1xi32> to vector<1x1xi32>
      %c1_i32_31 = arith.constant 1 : i32
      %58 = arith.cmpi sge, %43, %c1_i32_31 : i32
      %59 = arith.select %58, %57, %arg13 : vector<1x1xi32>
      scf.yield %59, %49 : vector<1x1xi32>, vector<1x1x16xi32>
    }
    %c0_25 = arith.constant 0 : index
    %c0_26 = arith.constant 0 : index
    %c0_27 = arith.constant 0 : index
    %42 = vector.load %arg8[%c0_25, %c0_26, %c0_27] : memref<1x1x16xi32, #tpu.memory_space<vmem>>, vector<1x1x16xi32>
    tpu.vector_store %arg8[%c0_25, %c0_26, %c0_27], %41#1 {strides = array<i32>} : memref<1x1x16xi32, #tpu.memory_space<vmem>>, vector<1x1x16xi32>,
    return
  }
  func.func @transform_0(%arg0: i32, %arg1: memref<2xi32, #tpu.memory_space<smem>>) -> (i32, i32, i32) {
    %c0_i32 = arith.constant 0 : i32
    %c0_i32_0 = arith.constant 0 : i32
    %c0_i32_1 = arith.constant 0 : i32
    return %arg0, %c0_i32, %c0_i32_0 : i32, i32, i32
  }
  func.func @transform_1(%arg0: i32, %arg1: memref<2xi32, #tpu.memory_space<smem>>) -> (i32, i32) {
    %c0_i32 = arith.constant 0 : i32
    %c0_i32_0 = arith.constant 0 : i32
    %c0_i32_1 = arith.constant 0 : i32
    return %c0_i32, %c0_i32_0 : i32, i32
  }
  func.func @transform_2(%arg0: i32, %arg1: memref<2xi32, #tpu.memory_space<smem>>) -> (i32, i32) {
    %c0_i32 = arith.constant 0 : i32
    %c0_i32_0 = arith.constant 0 : i32
    %c0_i32_1 = arith.constant 0 : i32
    return %c0_i32, %c0_i32_0 : i32, i32
  }
  func.func @transform_3(%arg0: i32, %arg1: memref<2xi32, #tpu.memory_space<smem>>) -> (i32, i32) {
    %c0_i32 = arith.constant 0 : i32
    %c0_i32_0 = arith.constant 0 : i32
    %c0_i32_1 = arith.constant 0 : i32
    return %c0_i32, %c0_i32_0 : i32, i32
  }
  func.func @transform_4(%arg0: i32, %arg1: memref<2xi32, #tpu.memory_space<smem>>) -> (i32, i32) {
    %c0_i32 = arith.constant 0 : i32
    %c0_i32_0 = arith.constant 0 : i32
    %c0_i32_1 = arith.constant 0 : i32
    return %c0_i32, %c0_i32_0 : i32, i32
  }
  func.func @transform_5(%arg0: i32, %arg1: memref<2xi32, #tpu.memory_space<smem>>) -> (i32, i32) {
    %c0_i32 = arith.constant 0 : i32
    %c0_i32_0 = arith.constant 0 : i32
    %c0_i32_1 = arith.constant 0 : i32
    return %c0_i32, %c0_i32_0 : i32, i32
  }
  func.func @transform_6(%arg0: i32, %arg1: memref<2xi32, #tpu.memory_space<smem>>) -> (i32, i32, i32) {
    %c0_i32 = arith.constant 0 : i32
    %c0_i32_0 = arith.constant 0 : i32
    %c0_i32_1 = arith.constant 0 : i32
    return %arg0, %c0_i32, %c0_i32_0 : i32, i32, i32
  }
  func.func @transform_7(%arg0: i32, %arg1: memref<2xi32, #tpu.memory_space<smem>>) -> (i32, i32, i32) {
    %c0_i32 = arith.constant 0 : i32
    %c0_i32_0 = arith.constant 0 : i32
    %c0_i32_1 = arith.constant 0 : i32
    return %arg0, %c0_i32, %c0_i32_0 : i32, i32, i32
  }
}

</mosaic_0001>

<llo_original>
// kernel: tpu_custom_call.1
$region0: #{tpu_custom_call.1}
  #allocation0 [shape = 'u32[]', space=smem, size = 0x4, offset = 0x4, fixed_abs, tag = 'smem constant byte address 0x4 - core index']
  #allocation1 [shape = 'u32[144,128]{1,0:T(1,128)}', space=vmem, size = 0x12000, scoped, tag = 'internal scratch']
  #allocation2 [shape = 'f32[16,128]{1,0:T(8,128)}', space=vmem, size = 0x2000, scoped, tag = 'scratch operand']
  #allocation3 [shape = 's32[16,128]{1,0:T(8,128)}', space=vmem, size = 0x2000, scoped, tag = 'scratch operand']
  #allocation4 [shape = 's32[1]{0}', space=sflag, size = 0x4, scoped, tag = 'scoped memory for tpu_custom_call.1']
  #allocation5 [shape = 'u8[512]{0}', space=smem, size = 0x200, scoped, tag = 'prefetched SMEM operand 0']
  %s0 = inlined_call_operand.hbm [shape: s32[2], index: 0, kind: input, shape index: {}]
  %s1 = inlined_call_operand.hbm [shape: bf16[2,16,32], index: 1, kind: input, shape index: {}]
  %s2 = inlined_call_operand.hbm [shape: bf16[32,128], index: 2, kind: input, shape index: {}]
  %s3 = inlined_call_operand.vmem [shape: f32[1,128], index: 3, kind: input, shape index: {}]
  %s4 = inlined_call_operand.vmem [shape: f32[1,128], index: 4, kind: input, shape index: {}]
  %s5 = inlined_call_operand.vmem [shape: f32[1,128], index: 5, kind: input, shape index: {}]
  %s6 = inlined_call_operand.vmem [shape: f32[8,128], index: 6, kind: input, shape index: {}]
  %s7 = inlined_call_operand.hbm [shape: s32[2,1,16], index: 7, kind: output, shape index: {0}]
  %s8 = inlined_call_operand.hbm [shape: f32[2,1,128], index: 8, kind: output, shape index: {1}]
  %9 = xla_tuple %s7, %s8
  %s10 = sld [smem:[#allocation0]]
  $region87: #{tpu_custom_call.1} parent=0
    _
  %s12 = ssub.s32 1, %s10
  %s13 = scalar_select 0, %s12, %s10
  %15 = dma.hbm_to_smem %s0, 16, [#allocation5], [#allocation4]
  %16 = dma.done [#allocation4], 16
  %17 = sfence
  $region1: #{tpu_custom_call.1} parent=0
    #allocation6 [shape = 'u8[8192]{0}', space=vmem, size = 0x2000, scoped, tag = 'input window, operand 1']
    #allocation7 [shape = 's32[2]{0}', space=sflag, size = 0x8, scoped, tag = 'scoped memory for tpu_custom_call.1']
    #allocation8 [shape = 's32[2]{0}', space=sflag, size = 0x8, scoped, tag = 'scoped memory for tpu_custom_call.1']
    #allocation9 [shape = 'u8[8192]{0}', space=vmem, size = 0x2000, scoped, tag = 'input window, operand 2, single buffered']
    #allocation10 [shape = 's32[1]{0}', space=sflag, size = 0x4, scoped, tag = 'scoped memory for tpu_custom_call.1']
    #allocation11 [shape = 'u8[1024]{0}', space=vmem, size = 0x400, scoped, tag = 'output window, operand 0']
    #allocation12 [shape = 'u8[1024]{0}', space=vmem, size = 0x400, scoped, tag = 'output window, operand 1']
    #allocation13 [shape = 's32[2]{0}', space=sflag, size = 0x8, scoped, tag = 'scoped memory for tpu_custom_call.1']
    %18 = vsyncpa [#allocation7], 0
    %s19 = scalar_lea.sflag [#allocation7], 1
    %20 = vsyncpa %s19, 0
    %21 = vsyncpa [#allocation10], 0
    %22 = vsyncpa [#allocation8], 0
    %s23 = scalar_lea.sflag [#allocation8], 1
    %24 = vsyncpa %s23, 0
    %25 = vsyncpa [#allocation13], 0
    %s26 = scalar_lea.sflag [#allocation13], 1
    %27 = vsyncpa %s26, 0
    loop: start=0, step=1, limit=4
    $region2: #{tpu_custom_call.1} parent=1 // loop_pre_header
      _
    $region3: #{tpu_custom_call.1} parent=1 // loop_header
      %s29 = sphi 0, %s33
      %p30 = scmp.ge.s32.totalorder %s29, 4
      %s39 = sphi 0, %s41
      %s42 = sphi 0, %s39
      %s43 = sphi 0, %s42
      %s59 = sphi 0, %s43
      %s63 = sphi 0, %s63
      %s65 = sphi 0, %s63
      %s66 = sphi 0, %s65
      %s80 = sphi 0, %s66
      %s84 = sphi 0, %s84
      %s86 = sphi 0, %s84
      %s87 = sphi 0, %s86
      %s101 = sphi 0, %s87
      %s105 = sphi 0, %s105
      %s107 = sphi 0, %s105
      %s108 = sphi 0, %s107
      %s122 = sphi 0, %s108
      %s126 = sphi 0, %s126
      %s128 = sphi 0, %s126
      %s129 = sphi 0, %s128
      %s143 = sphi 0, %s129
      %s147 = sphi 0, %s147
      %s149 = sphi 0, %s147
      %s150 = sphi 0, %s149
      %s164 = sphi 0, %s150
      %s170 = sphi 0, %s172
      %s173 = sphi 0, %s170
      %s174 = sphi 0, %s173
      %s190 = sphi 0, %s174
      %s196 = sphi 0, %s198
      %s199 = sphi 0, %s196
      %s200 = sphi 0, %s199
      %s216 = sphi 0, %s200
    $region4: #{tpu_custom_call.1} parent=1 // loop_header_branch
      %32 = sbr.rel (%p30) target = $region8
    $region5: #{tpu_custom_call.1} parent=1 // loop_body
      %s34 = ssub.s32 %s29, 1
      %s35 = ssub.s32 %s29, 2
      %s36 = sadd.s32 %s29, 1
      %s37 = ssub.s32 %s29, %s36
      %p38 = scmp.eq.s32.totalorder %s37, 0
      %s40 = sadd.s32 %s39, 1
      %s41 = scalar_select %p38, %s39, %s40
      %p44 = pneg %p38
      %p45 = scmp.eq.s32.totalorder %s29, 1
      %p46 = por %p44, %p45
      %p47 = scmp.ne.s32.totalorder %s39, %s42
      %p48 = scmp.eq.s32.totalorder %s29, 0
      %p49 = por %p47, %p48
      %p50 = scmp.ne.s32.totalorder %s39, %s42
      %p51 = scmp.eq.s32.totalorder %s34, 1
      %p52 = por %p50, %p51
      %p53 = scmp.ne.s32.totalorder %s42, %s43
      %p54 = scmp.eq.s32.totalorder %s34, 0
      %p55 = por %p53, %p54
      %p56 = scmp.ne.s32.totalorder %s42, %s43
      %p57 = scmp.eq.s32.totalorder %s35, 1
      %p58 = por %p56, %p57
      %p60 = scmp.ne.s32.totalorder %s43, %s59
      %p61 = scmp.eq.s32.totalorder %s35, 0
      %p62 = por %p60, %p61
      %s64 = sadd.s32 %s63, 1
      %p67 = scmp.eq.s32.totalorder %s29, 1
      %p68 = scmp.ne.s32.totalorder %s63, %s65
      %p69 = scmp.eq.s32.totalorder %s29, 0
      %p70 = por %p68, %p69
      %p71 = scmp.ne.s32.totalorder %s63, %s65
      %p72 = scmp.eq.s32.totalorder %s34, 1
      %p73 = por %p71, %p72
      %p74 = scmp.ne.s32.totalorder %s65, %s66
      %p75 = scmp.eq.s32.totalorder %s34, 0
      %p76 = por %p74, %p75
      %p77 = scmp.ne.s32.totalorder %s65, %s66
      %p78 = scmp.eq.s32.totalorder %s35, 1
      %p79 = por %p77, %p78
      %p81 = scmp.ne.s32.totalorder %s66, %s80
      %p82 = scmp.eq.s32.totalorder %s35, 0
      %p83 = por %p81, %p82
      %s85 = sadd.s32 %s84, 1
      %p88 = scmp.eq.s32.totalorder %s29, 1
      %p89 = scmp.ne.s32.totalorder %s84, %s86
      %p90 = scmp.eq.s32.totalorder %s29, 0
      %p91 = por %p89, %p90
      %p92 = scmp.ne.s32.totalorder %s84, %s86
      %p93 = scmp.eq.s32.totalorder %s34, 1
      %p94 = por %p92, %p93
      %p95 = scmp.ne.s32.totalorder %s86, %s87
      %p96 = scmp.eq.s32.totalorder %s34, 0
      %p97 = por %p95, %p96
      %p98 = scmp.ne.s32.totalorder %s86, %s87
      %p99 = scmp.eq.s32.totalorder %s35, 1
      %p100 = por %p98, %p99
      %p102 = scmp.ne.s32.totalorder %s87, %s101
      %p103 = scmp.eq.s32.totalorder %s35, 0
      %p104 = por %p102, %p103
      %s106 = sadd.s32 %s105, 1
      %p109 = scmp.eq.s32.totalorder %s29, 1
      %p110 = scmp.ne.s32.totalorder %s105, %s107
      %p111 = scmp.eq.s32.totalorder %s29, 0
      %p112 = por %p110, %p111
      %p113 = scmp.ne.s32.totalorder %s105, %s107
      %p114 = scmp.eq.s32.totalorder %s34, 1
      %p115 = por %p113, %p114
      %p116 = scmp.ne.s32.totalorder %s107, %s108
      %p117 = scmp.eq.s32.totalorder %s34, 0
      %p118 = por %p116, %p117
      %p119 = scmp.ne.s32.totalorder %s107, %s108
      %p120 = scmp.eq.s32.totalorder %s35, 1
      %p121 = por %p119, %p120
      %p123 = scmp.ne.s32.totalorder %s108, %s122
      %p124 = scmp.eq.s32.totalorder %s35, 0
      %p125 = por %p123, %p124
      %s127 = sadd.s32 %s126, 1
      %p130 = scmp.eq.s32.totalorder %s29, 1
      %p131 = scmp.ne.s32.totalorder %s126, %s128
      %p132 = scmp.eq.s32.totalorder %s29, 0
      %p133 = por %p131, %p132
      %p134 = scmp.ne.s32.totalorder %s126, %s128
      %p135 = scmp.eq.s32.totalorder %s34, 1
      %p136 = por %p134, %p135
      %p137 = scmp.ne.s32.totalorder %s128, %s129
      %p138 = scmp.eq.s32.totalorder %s34, 0
      %p139 = por %p137, %p138
      %p140 = scmp.ne.s32.totalorder %s128, %s129
      %p141 = scmp.eq.s32.totalorder %s35, 1
      %p142 = por %p140, %p141
      %p144 = scmp.ne.s32.totalorder %s129, %s143
      %p145 = scmp.eq.s32.totalorder %s35, 0
      %p146 = por %p144, %p145
      %s148 = sadd.s32 %s147, 1
      %p151 = scmp.eq.s32.totalorder %s29, 1
      %p152 = scmp.ne.s32.totalorder %s147, %s149
      %p153 = scmp.eq.s32.totalorder %s29, 0
      %p154 = por %p152, %p153
      %p155 = scmp.ne.s32.totalorder %s147, %s149
      %p156 = scmp.eq.s32.totalorder %s34, 1
      %p157 = por %p155, %p156
      %p158 = scmp.ne.s32.totalorder %s149, %s150
      %p159 = scmp.eq.s32.totalorder %s34, 0
      %p160 = por %p158, %p159
      %p161 = scmp.ne.s32.totalorder %s149, %s150
      %p162 = scmp.eq.s32.totalorder %s35, 1
      %p163 = por %p161, %p162
      %p165 = scmp.ne.s32.totalorder %s150, %s164
      %p166 = scmp.eq.s32.totalorder %s35, 0
      %p167 = por %p165, %p166
      %s168 = ssub.s32 %s29, %s36
      %p169 = scmp.eq.s32.totalorder %s168, 0
      %s171 = sadd.s32 %s170, 1
      %s172 = scalar_select %p169, %s170, %s171
      %p175 = pneg %p169
      %p176 = scmp.eq.s32.totalorder %s29, 1
      %p177 = por %p175, %p176
      %p178 = scmp.ne.s32.totalorder %s170, %s173
      %p179 = scmp.eq.s32.totalorder %s29, 0
      %p180 = por %p178, %p179
      %p181 = scmp.ne.s32.totalorder %s170, %s173
      %p182 = scmp.eq.s32.totalorder %s34, 1
      %p183 = por %p181, %p182
      %p184 = scmp.ne.s32.totalorder %s173, %s174
      %p185 = scmp.eq.s32.totalorder %s34, 0
      %p186 = por %p184, %p185
      %p187 = scmp.ne.s32.totalorder %s173, %s174
      %p188 = scmp.eq.s32.totalorder %s35, 1
      %p189 = por %p187, %p188
      %p191 = scmp.ne.s32.totalorder %s174, %s190
      %p192 = scmp.eq.s32.totalorder %s35, 0
      %p193 = por %p191, %p192
      %s194 = ssub.s32 %s29, %s36
      %p195 = scmp.eq.s32.totalorder %s194, 0
      %s197 = sadd.s32 %s196, 1
      %s198 = scalar_select %p195, %s196, %s197
      %p201 = pneg %p195
      %p202 = scmp.eq.s32.totalorder %s29, 1
      %p203 = por %p201, %p202
      %p204 = scmp.ne.s32.totalorder %s196, %s199
      %p205 = scmp.eq.s32.totalorder %s29, 0
      %p206 = por %p204, %p205
      %p207 = scmp.ne.s32.totalorder %s196, %s199
      %p208 = scmp.eq.s32.totalorder %s34, 1
      %p209 = por %p207, %p208
      %p210 = scmp.ne.s32.totalorder %s199, %s200
      %p211 = scmp.eq.s32.totalorder %s34, 0
      %p212 = por %p210, %p211
      %p213 = scmp.ne.s32.totalorder %s199, %s200
      %p214 = scmp.eq.s32.totalorder %s35, 1
      %p215 = por %p213, %p214
      %p217 = scmp.ne.s32.totalorder %s200, %s216
      %p218 = scmp.eq.s32.totalorder %s35, 0
      %p219 = por %p217, %p218
      %p220 = scmp.le.s32.totalorder 1, %s29
      %p221 = scmp.lt.s32.totalorder %s29, 3
      %p222 = pnand %p220, %p221
      %p223 = pneg %p222
      // Predicated region
      $region9: #{tpu_custom_call.1} parent=5 // pred_check
        _
      $region10: #{tpu_custom_call.1} parent=5 // pred_check_branch
        %225 = sbr.rel (%p222) target = $region12
      $region11: #{tpu_custom_call.1} parent=5 // pred_region
        %s226 = ssub.s32 %s29, 1
        // Predicated region
        $region13: #{tpu_custom_call.1} parent=11 // pred_check
          %p227 = pneg %p76
        $region14: #{tpu_custom_call.1} parent=11 // pred_check_branch
          %229 = sbr.rel (%p227) target = $region16
        $region15: #{tpu_custom_call.1} parent=11 // pred_region
          %s231 = ssub.s32 256, 256
          %232 = vsyncadd [#allocation10], %s231
          %s233 = sshll.u32 [#allocation9], 4
          %s234 = int_to_ptr.vmem [resolvable:$true] %s233
          %239 = dma.hbm_to_vmem [thread:$0]  %s2, 256, %s234, [#allocation10], 64, 64, 4
        $region16: #{tpu_custom_call.1} parent=11 // pred_fallthru
          _
        // Predicated region
        $region17: #{tpu_custom_call.1} parent=11 // pred_check
          %p240 = pneg %p97
        $region18: #{tpu_custom_call.1} parent=11 // pred_check_branch
          %242 = sbr.rel (%p240) target = $region20
        $region19: #{tpu_custom_call.1} parent=11 // pred_region
          _
        $region20: #{tpu_custom_call.1} parent=11 // pred_fallthru
          _
        // Predicated region
        $region21: #{tpu_custom_call.1} parent=11 // pred_check
          %p243 = pneg %p118
        $region22: #{tpu_custom_call.1} parent=11 // pred_check_branch
          %245 = sbr.rel (%p243) target = $region24
        $region23: #{tpu_custom_call.1} parent=11 // pred_region
          _
        $region24: #{tpu_custom_call.1} parent=11 // pred_fallthru
          _
        // Predicated region
        $region25: #{tpu_custom_call.1} parent=11 // pred_check
          %p246 = pneg %p139
        $region26: #{tpu_custom_call.1} parent=11 // pred_check_branch
          %248 = sbr.rel (%p246) target = $region28
        $region27: #{tpu_custom_call.1} parent=11 // pred_region
          _
        $region28: #{tpu_custom_call.1} parent=11 // pred_fallthru
          _
        // Predicated region
        $region29: #{tpu_custom_call.1} parent=11 // pred_check
          %p249 = pneg %p160
        $region30: #{tpu_custom_call.1} parent=11 // pred_check_branch
          %251 = sbr.rel (%p249) target = $region32
        $region31: #{tpu_custom_call.1} parent=11 // pred_region
          _
        $region32: #{tpu_custom_call.1} parent=11 // pred_fallthru
          _
      $region12: #{tpu_custom_call.1} parent=5 // pred_fallthru
        _
      %p252 = scmp.lt.s32.totalorder %s29, 2
      // Predicated region
      $region33: #{tpu_custom_call.1} parent=5 // pred_check
        %p253 = pneg %p252
      $region34: #{tpu_custom_call.1} parent=5 // pred_check_branch
        %255 = sbr.rel (%p253) target = $region36
      $region35: #{tpu_custom_call.1} parent=5 // pred_region
        // Predicated region
        $region37: #{tpu_custom_call.1} parent=35 // pred_check
          %p256 = pneg %p49
        $region38: #{tpu_custom_call.1} parent=35 // pred_check_branch
          %258 = sbr.rel (%p256) target = $region40
        $region39: #{tpu_custom_call.1} parent=35 // pred_region
          %s259 = sand.u32 %s39, 1
          %s260 = scalar_lea.sflag [#allocation7], %s259
          %s261 = sand.u32 %s39, 1
          %s262 = smul.addr %s261, 8
          %s263 = scalar_lea.vmem [#allocation6], %s262
          %s265 = ssub.s32 128, 128
          %266 = vsyncadd %s260, %s265
          %s267 = smul.addr %s29, 2
          %s268 = smul.addr %s267, 64
          %s269 = scalar_lea.hbm %s1, %s268
          %s270 = sshll.u32 %s263, 4
          %s271 = int_to_ptr.vmem [resolvable:$true] %s270
          %276 = dma.hbm_to_vmem [thread:$0]  %s269, 128, %s271, %s260, 64, 64, 4
        $region40: #{tpu_custom_call.1} parent=35 // pred_fallthru
          _
      $region36: #{tpu_custom_call.1} parent=5 // pred_fallthru
        _
      %p277 = scmp.le.s32.totalorder 1, %s29
      %p278 = scmp.lt.s32.totalorder %s29, 3
      %p279 = pnand %p277, %p278
      %p280 = pneg %p279
      // Predicated region
      $region41: #{tpu_custom_call.1} parent=5 // pred_check
        _
      $region42: #{tpu_custom_call.1} parent=5 // pred_check_branch
        %282 = sbr.rel (%p279) target = $region44
      $region43: #{tpu_custom_call.1} parent=5 // pred_region
        %s283 = ssub.s32 %s29, 1
        %s284 = sand.u32 %s42, 1
        %s285 = scalar_lea.sflag [#allocation7], %s284
        %s286 = sand.u32 %s42, 1
        %s287 = smul.addr %s286, 8
        %s288 = scalar_lea.vmem [#allocation6], %s287
        // Predicated region
        $region45: #{tpu_custom_call.1} parent=43 // pred_check
          %p289 = pneg %p55
        $region46: #{tpu_custom_call.1} parent=43 // pred_check_branch
          %291 = sbr.rel (%p289) target = $region48
        $region47: #{tpu_custom_call.1} parent=43 // pred_region
          %292 = dma.done %s285, 128
        $region48: #{tpu_custom_call.1} parent=43 // pred_fallthru
          _
        // Predicated region
        $region49: #{tpu_custom_call.1} parent=43 // pred_check
          %p293 = pneg %p76
        $region50: #{tpu_custom_call.1} parent=43 // pred_check_branch
          %295 = sbr.rel (%p293) target = $region52
        $region51: #{tpu_custom_call.1} parent=43 // pred_region
          %296 = dma.done [#allocation10], 256
        $region52: #{tpu_custom_call.1} parent=43 // pred_fallthru
          _
        %s297 = sand.u32 %s42, 1
        %s298 = scalar_lea.sflag [#allocation7], %s297
        %s299 = sand.u32 %s42, 1
        %s300 = smul.addr %s299, 8
        %s301 = scalar_lea.vmem [#allocation6], %s300
        %p302 = pneg %p55
        %p303 = pneg %p52
        %p304 = pneg %p76
        %p305 = pneg %p73
        %p306 = pneg %p97
        %p307 = pneg %p94
        %p308 = pneg %p118
        %p309 = pneg %p115
        %p310 = pneg %p139
        %p311 = pneg %p136
        %p312 = pneg %p160
        %p313 = pneg %p157
        %p314 = pneg %p186
        %p315 = pneg %p183
        %s316 = sand.u32 %s173, 1
        %s317 = scalar_lea.sflag [#allocation8], %s316
        %s318 = sand.u32 %s173, 1
        %s319 = scalar_lea.vmem [#allocation11], %s318
        %p320 = pneg %p212
        %p321 = pneg %p209
        %s322 = sand.u32 %s199, 1
        %s323 = scalar_lea.sflag [#allocation13], %s322
        %s324 = sand.u32 %s199, 1
        %s325 = scalar_lea.vmem [#allocation12], %s324
        %v327 = vld [vmem:[%s288] sm:$0xf]
        %v328 = vld [vmem:[%s288 + $0x4] sm:$0xf]
        %v329 = vld [vmem:[#allocation9] sm:$0xf]
        %v330 = vld [vmem:[#allocation9 + $0x4] sm:$0xf]
        %v331 = vld [vmem:[#allocation9 + $0x8] sm:$0xf]
        %v332 = vld [vmem:[#allocation9 + $0xc] sm:$0xf]
        %v333 = vld [vmem:[%s3] sm:$0x1]
        %v335 = vlaneseq
        %v336 = vshrl.u32 %v335, 7
        %v337 = vsub.s32 0, %v336
        %v338 = vrot.slane %v333, %v337
        %v342 = vunpack.c.l.b16 %v327
        %v343 = vunpack.c.l.b16 %v328
        %v344 = vpack.c.b16 %v343, %v342
        %v349 = vunpack.c.l.b16 %v329
        %v350 = vunpack.c.l.b16 %v330
        %v351 = vunpack.c.l.b16 %v331
        %v352 = vunpack.c.l.b16 %v332
        %v353 = vpack.c.b16 %v350, %v349
        %v354 = vpack.c.b16 %v352, %v351
        %vm357 = vcmask 261120
        %v359 = vsel %vm357, %v344, 0
        %361 = vmatprep.subr.bf16.mxu0 0
        %362 = vmatpush1.bf16.msra.mxu0 %v353
        %363 = vmatprep.subr.bf16.mxu0 0
        %364 = vmatpush1.bf16.msra.mxu0 %v354
        %365 = vmatprep.subr.bf16.mxu0 0
        %366 = vmatpush1.bf16.msra.mxu0 0
        %367 = vmatprep.subr.bf16.mxu0 0
        %368 = vmatpush1.bf16.msra.mxu0 0
        %369 = vmatprep.subr.bf16.mxu0 0
        %370 = vmatpush1.bf16.msra.mxu0 0
        %371 = vmatprep.subr.bf16.mxu0 0
        %372 = vmatpush1.bf16.msra.mxu0 0
        %373 = vmatprep.subr.bf16.mxu0 0
        %374 = vmatpush1.bf16.msra.mxu0 0
        %375 = vmatprep.subr.bf16.mxu0 0
        %376 = vmatpush1.bf16.msra.mxu0 0
        %377 = vmatprep.subr.bf16.mxu0 0
        %378 = vmatpush1.bf16.msra.mxu0 0
        %379 = vmatprep.subr.bf16.mxu0 0
        %380 = vmatpush1.bf16.msra.mxu0 0
        %381 = vmatprep.subr.bf16.mxu0 0
        %382 = vmatpush1.bf16.msra.mxu0 0
        %383 = vmatprep.subr.bf16.mxu0 0
        %384 = vmatpush1.bf16.msra.mxu0 0
        %385 = vmatprep.subr.bf16.mxu0 0
        %386 = vmatpush1.bf16.msra.mxu0 0
        %387 = vmatprep.subr.bf16.mxu0 0
        %388 = vmatpush1.bf16.msra.mxu0 0
        %389 = vmatprep.subr.bf16.mxu0 0
        %390 = vmatpush1.bf16.msra.mxu0 0
        %391 = vmatprep.subr.bf16.mxu0 0
        %392 = vmatpush1.bf16.msra.mxu0 0
        %393 = vmatprep.mubr.bf16.mxu0 0
        %394 = vmatmul.mubr.bf16.gmra.mrb[0].mxu0 %v359
        %v395 = vpop.f32.mrb[0].mxu0
        %v396 = vadd.f32 %v338, %v395
        %v397 = vpop.f32.mrb[0].mxu0
        %v398 = vpop.f32.mrb[0].mxu0
        %v399 = vadd.f32 %v338, %v398
        %v400 = vpop.f32.mrb[0].mxu0
        %401 = vdwg.mxu0
        %402 = vst [vmem:[#allocation2] sm:$0xff] %v396
        %403 = vst [vmem:[#allocation2 + $0x8] sm:$0xff] %v399
        %404 = vst [vmem:[%s325] sm:$0x1] %v396
        %v405 = vlaneseq
        %v406 = vand.u32 %v405, 127
        %v407 = vlaneseq
        %v408 = vshrl.u32 %v407, 7
        %vm409 = vcmp.eq.s32.totalorder %v406, %v408
        %v410 = vld [vmem:[%s6] sm:$0xff]
        %s411 = sld [smem:[#allocation5 + %s34]]
        %412 = vst [vmem:[#allocation3] sm:$0x1] 0
        %v413 = vld [vmem:[%s4] sm:$0x1]
        %v414 = vadd.f32 %v413, %v396
        // While loop
        $region53: #{tpu_custom_call.1} parent=43 // loop_pre_header
          _
        $region54: #{tpu_custom_call.1} parent=43 // loop_header
          %s416 = sphi 1, %s418
          %p417 = scmp.ge.s32.totalorder %s416, %s411
          %v421 = vphi %v414, %v442
        $region55: #{tpu_custom_call.1} parent=43 // loop_header_branch
          %420 = sbr.rel (%p417) target = $region59
        $region56: #{tpu_custom_call.1} parent=43 // loop_body
          %s422 = scalar_lea.vmem [#allocation2], %s416
          %v423 = vld [vmem:[%s422] sm:$0x1]
          %v424 = vlaneseq
          %v425 = vshrl.u32 %v424, 7
          %v426 = vsub.s32 0, %v425
          %v427 = vrot.slane %v421, %v426
          %v428 = vsel %vm409, %v427, 0.0
          %429 = vadd.xlane.f32.xlu0 %v428
          %v430 = vpop.xlane.xlu0 %429
          %v431 = vadd.f32 %v430, %v410
          %v432 = vlaneseq
          %v433 = vshrl.u32 %v432, 7
          %v434 = vsub.s32 0, %v433
          %v435 = vrot.slane %v423, %v434
          %v436 = vadd.f32 %v431, %v435
          %v437 = vrot.slane %v436, 4
          %v438 = vmax.f32 %v436, %v437
          %v439 = vrot.slane %v438, 2
          %v440 = vmax.f32 %v438, %v439
          %v441 = vrot.slane %v440, 1
          %v442 = vmax.f32 %v440, %v441
          %vm443 = vcmp.eq.f32.partialorder %v436, %v442
          %v444 = vsel %vm443, %v408, 8
          %v445 = vrot.slane %v444, 4
          %vm446 = vcmp.lt.s32.totalorder %v444, %v445
          %v447 = vsel %vm446, %v444, %v445
          %v448 = vrot.slane %v447, 2
          %vm449 = vcmp.lt.s32.totalorder %v447, %v448
          %v450 = vsel %vm449, %v447, %v448
          %v451 = vrot.slane %v450, 1
          %vm452 = vcmp.lt.s32.totalorder %v450, %v451
          %v453 = vsel %vm452, %v450, %v451
          %s454 = scalar_lea.vmem [#allocation3], %s416
          %455 = vst [vmem:[%s454] sm:$0x1] %v453
        $region57: #{tpu_custom_call.1} parent=43 // loop_footer
          %s418 = sadd.s32 %s416, 1
        $region58: #{tpu_custom_call.1} parent=43 // loop_footer_branch
          %415 = sbr.rel target = $region54
        $region59: #{tpu_custom_call.1} parent=43 // loop_exit
          _
        %v456 = vld [vmem:[%s5] sm:$0x1]
        %v457 = vadd.f32 %v421, %v456
        %vm458 = vcmask 1040384
        %v459 = vsel %vm458, %v457, -inf
        %460 = vmax.xlane.f32.xlu0 %v459
        %v461 = vpop.xlane.xlu0 %460
        %vm462 = vcmp.eq.f32.partialorder %v457, %v461
        %v463 = vsel %vm462, %v406, 128
        %v464 = vsel %vm458, %v463, 2147483647
        %v465 = vand.u32 %v464, 65535
        %v466 = vshra.s32 %v464, 16
        %v467 = vcvt.s32.f32 %v465
        %v468 = vcvt.s32.f32 %v466
        %469 = vmin.xlane.f32.xlu0 %v468
        %v470 = vpop.xlane.xlu0 %469
        %vm471 = vcmp.eq.f32.partialorder %v468, %v470
        %v472 = vsel %vm471, %v467, inf
        %473 = vmin.xlane.f32.xlu0 %v472
        %v474 = vpop.xlane.xlu0 %473
        %v475 = vcvt.f32.s32 %v474
        %v476 = vcvt.f32.s32 %v470
        %v477 = vshll.u32 %v476, 16
        %v478 = vadd.s32 %v477, %v475
        %s479 = ssub.s32 %s411, 1
        // While loop
        $region60: #{tpu_custom_call.1} parent=43 // loop_pre_header
          _
        $region61: #{tpu_custom_call.1} parent=43 // loop_header
          %s481 = sphi 0, %s483
          %p482 = scmp.ge.s32.totalorder %s481, %s411
          %v486 = vphi %v478, %v513
          %v487 = vphi 4294967295, %v491
        $region62: #{tpu_custom_call.1} parent=43 // loop_header_branch
          %485 = sbr.rel (%p482) target = $region66
        $region63: #{tpu_custom_call.1} parent=43 // loop_body
          %s488 = ssub.s32 %s479, %s481
          %v489 = vstv %s488
          %vm490 = vcmp.eq.s32.totalorder %v406, %v489
          %v491 = vsel %vm490, %v486, %v487
          %s492 = scalar_lea.vmem [#allocation3], %s488
          %v493 = vld [vmem:[%s492] sm:$0x1]
          %vm494 = vcmp.eq.s32.totalorder %v406, %v486
          %v495 = vsel %vm494, %v493, 0
          %v496 = vsel %vm458, %v495, 0
          %v497 = vand.u32 %v496, 65535
          %v498 = vshrl.u32 %v496, 16
          %v499 = vcvt.s32.f32 %v497
          %v500 = vcvt.s32.f32 %v498
          %501 = vadd.xlane.f32.xlu0 %v499
          %v502 = vpop.xlane.xlu0 %501
          %503 = vadd.xlane.f32.xlu0 %v500
          %v504 = vpop.xlane.xlu0 %503
          %v505 = vcvt.f32.s32 %v502
          %v506 = vcvt.f32.s32 %v504
          %v507 = vshll.u32 %v506, 16
          %v508 = vadd.s32 %v507, %v505
          %p509 = scmp.ge.s32.totalorder %s488, 1
          %s510 = scalar_select %p509, 1, 0
          %v511 = vstv %s510
          %vm512 = vcmp.eq.s32.totalorder %v511, 1
          %v513 = vsel %vm512, %v508, %v486
        $region64: #{tpu_custom_call.1} parent=43 // loop_footer
          %s483 = sadd.s32 %s481, 1
        $region65: #{tpu_custom_call.1} parent=43 // loop_footer_branch
          %480 = sbr.rel target = $region61
        $region66: #{tpu_custom_call.1} parent=43 // loop_exit
          _
        %vm514 = vcmask 122880
        %515 = vst.msk [vmem:[%s319] sm:$0x1] %vm514, %v487
        %s516 = sand.u32 %s173, 1
        %s517 = scalar_lea.sflag [#allocation8], %s516
        %s518 = sand.u32 %s173, 1
        %s519 = scalar_lea.vmem [#allocation11], %s518
        %s520 = sand.u32 %s199, 1
        %s521 = scalar_lea.sflag [#allocation13], %s520
        %s522 = sand.u32 %s199, 1
        %s523 = scalar_lea.vmem [#allocation12], %s522
        // Predicated region
        $region67: #{tpu_custom_call.1} parent=43 // pred_check
          %p524 = pneg %p183
        $region68: #{tpu_custom_call.1} parent=43 // pred_check_branch
          %526 = sbr.rel (%p524) target = $region70
        $region69: #{tpu_custom_call.1} parent=43 // pred_region
          %s528 = ssub.s32 16, 16
          %529 = vsyncadd %s517, %s528
          %s530 = smul.addr %s34, 16
          %s531 = scalar_lea.hbm %s7, %s530
          %s533 = sshll.u32 %s519, 4
          %s534 = int_to_ptr.vmem [resolvable:$true] %s533
          %536 = dma.vmem_to_hbm [thread:$0]  %s534, 16, %s531, %s517
        $region70: #{tpu_custom_call.1} parent=43 // pred_fallthru
          _
        // Predicated region
        $region71: #{tpu_custom_call.1} parent=43 // pred_check
          %p537 = pneg %p209
        $region72: #{tpu_custom_call.1} parent=43 // pred_check_branch
          %539 = sbr.rel (%p537) target = $region74
        $region73: #{tpu_custom_call.1} parent=43 // pred_region
          %s541 = ssub.s32 16, 16
          %542 = vsyncadd %s521, %s541
          %s543 = smul.addr %s34, 16
          %s544 = scalar_lea.hbm %s8, %s543
          %s546 = sshll.u32 %s523, 4
          %s547 = int_to_ptr.vmem [resolvable:$true] %s546
          %549 = dma.vmem_to_hbm [thread:$0]  %s547, 16, %s544, %s521
        $region74: #{tpu_custom_call.1} parent=43 // pred_fallthru
          _
      $region44: #{tpu_custom_call.1} parent=5 // pred_fallthru
        _
      %p550 = scmp.le.s32.totalorder 2, %s29
      // Predicated region
      $region75: #{tpu_custom_call.1} parent=5 // pred_check
        %p551 = pneg %p550
      $region76: #{tpu_custom_call.1} parent=5 // pred_check_branch
        %553 = sbr.rel (%p551) target = $region78
      $region77: #{tpu_custom_call.1} parent=5 // pred_region
        %s554 = ssub.s32 %s29, 2
        // Predicated region
        $region79: #{tpu_custom_call.1} parent=77 // pred_check
          %p555 = pneg %p189
        $region80: #{tpu_custom_call.1} parent=77 // pred_check_branch
          %557 = sbr.rel (%p555) target = $region82
        $region81: #{tpu_custom_call.1} parent=77 // pred_region
          %s558 = sand.u32 %s174, 1
          %s559 = scalar_lea.sflag [#allocation8], %s558
          %s560 = sand.u32 %s174, 1
          %s561 = scalar_lea.vmem [#allocation11], %s560
          %562 = dma.done %s559, 16
        $region82: #{tpu_custom_call.1} parent=77 // pred_fallthru
          _
        // Predicated region
        $region83: #{tpu_custom_call.1} parent=77 // pred_check
          %p563 = pneg %p215
        $region84: #{tpu_custom_call.1} parent=77 // pred_check_branch
          %565 = sbr.rel (%p563) target = $region86
        $region85: #{tpu_custom_call.1} parent=77 // pred_region
          %s566 = sand.u32 %s200, 1
          %s567 = scalar_lea.sflag [#allocation13], %s566
          %s568 = sand.u32 %s200, 1
          %s569 = scalar_lea.vmem [#allocation12], %s568
          %570 = dma.done %s567, 16
        $region86: #{tpu_custom_call.1} parent=77 // pred_fallthru
          _
      $region78: #{tpu_custom_call.1} parent=5 // pred_fallthru
        _
    $region6: #{tpu_custom_call.1} parent=1 // loop_footer
      %s33 = sadd.s32 1, %s29
    $region7: #{tpu_custom_call.1} parent=1 // loop_footer_branch
      %28 = sbr.rel target = $region3
    $region8: #{tpu_custom_call.1} parent=1 // loop_exit
      _
    %571 = vsyncpa [#allocation7], 1
    %s572 = scalar_lea.sflag [#allocation7], 1
    %573 = vsyncpa %s572, 1
    %574 = vsyncpa [#allocation10], 1
    %575 = vsyncpa [#allocation8], 1
    %s576 = scalar_lea.sflag [#allocation8], 1
    %577 = vsyncpa %s576, 1
    %578 = vsyncpa [#allocation13], 1
    %s579 = scalar_lea.sflag [#allocation13], 1
    %580 = vsyncpa %s579, 1

</llo_original>
